<compile_context>
chip_gen: v7x
topology: tpu7x:2x2x1
jax: 0.10.0
libtpu: 0.0.40
codegen_flags: <defaults>
</compile_context>

<pallas_src>
import jax
import jax.numpy as jnp
from jax.experimental import pallas as pl
from jax.experimental.pallas import tpu as pltpu


def grid_seg_kernel(x_ref, wc_ref, bc_ref, out_ref):
    """One (image-batch, lane-tile) block of the fully fused GridSeg head.

    x_ref  : (Nb, C_in, L)   NCHW-native pixel tile (lane axis = pixels)
    wc_ref : (C_out, C_in)   fused weight  Wc = W2ᵀ @ W1ᵀ  (cls rows first, conf last)
    bc_ref : (C_out, 1)      fused bias    bc = W2ᵀ b1 + b2
    out_ref: (Nb, C_out, L)  cls channels first, conf channel (sigmoid) last
    """
    w = wc_ref[...]
    b = bc_ref[...]
    nb = x_ref.shape[0]
    c_out = out_ref.shape[1]
    for n in range(nb):  # Nb is a small static constant -> unrolled
        out = jnp.dot(w, x_ref[n], preferred_element_type=jnp.float32) + b
        # Sigmoid only on the confidence channel (last row); EUP slot is free
        # here, so compute on the whole tile and select.
        row = jax.lax.broadcasted_iota(jnp.int32, out.shape, 0)
        out = jnp.where(row == c_out - 1, jax.nn.sigmoid(out), out)
        out_ref[n] = out.astype(out_ref.dtype)


def pack_params(params):
    """Fuse both 1x1-conv stacks into ONE (C_out, C_in) matmul + bias.

    No nonlinearity sits between the two convs, so
        cls  =          x @ (W1_cls  @ W2_cls)  + (b1_cls  @ W2_cls  + b2_cls)
        conf = sigmoid( x @ (W1_conf @ W2_conf) + (b1_conf @ W2_conf + b2_conf) )
    Weights here are stored PyTorch-Conv2d(k=1)-style as (in, out) matrices.
    Class channels come first, the confidence channel is last, matching
    torch.cat((class_output, conf_output), dim=1).
    """
    wc_cls = params["w1_cls"] @ params["w2_cls"]                          # (C_in, num_classes)
    wc_conf = params["w1_conf"] @ params["w2_conf"]                       # (C_in, 1)
    bc_cls = params["b1_cls"] @ params["w2_cls"] + params["b2_cls"]       # (1, num_classes)
    bc_conf = params["b1_conf"] @ params["w2_conf"] + params["b2_conf"]   # (1, 1)

    wc = jnp.concatenate([wc_cls, wc_conf], axis=1)                       # (C_in, C_out)
    bc = jnp.concatenate([bc_cls, bc_conf], axis=1)                       # (1, C_out)
    wct = jnp.transpose(wc).astype(jnp.float32)                           # (C_out, C_in)
    bct = jnp.transpose(bc).astype(jnp.float32)                           # (C_out, 1)
    return wct, bct


def grid_seg_forward(x_nchw, params, *, lane_tile=8192):
    """x_nchw: (N, num_1, H, W) -> (N, num_classes + 1, H, W) f32."""
    N, C_in, H, W = x_nchw.shape
    wc, bc = pack_params(params)
    C_out = wc.shape[0]
    HW = H * W

    # NCHW-native: flatten pixels onto the lane axis. Reshape only — no pad,
    # no dtype cast, no transpose (each of those would be an extra HBM pass).
    x3d = x_nchw.reshape(N, C_in, HW)

    lane_tile = max(128, (lane_tile // 128) * 128)
    if HW >= lane_tile:
        # Large images: big lane tiles; partial last tile is masked by Pallas.
        L, Nb = lane_tile, 1
    else:
        # Small images: whole image per tile (full-dim minor block, so any HW
        # is legal) and batch Nb images per grid step to keep the per-step DMA
        # payload large enough to amortize the ~0.35 us step overhead.
        L = HW
        Nb = max(1, min(N, lane_tile // max(HW, 1)))
        if Nb >= N and N > 1:
            Nb = pl.cdiv(N, 2)  # keep >= 2 grid steps so both v7x TCs get work
    grid = (pl.cdiv(N, Nb), pl.cdiv(HW, L))

    out3d = pl.pallas_call(
        grid_seg_kernel,
        out_shape=jax.ShapeDtypeStruct((N, C_out, HW), jnp.float32),
        grid_spec=pltpu.PrefetchScalarGridSpec(
            num_scalar_prefetch=0,
            grid=grid,
            in_specs=[
                pl.BlockSpec((Nb, C_in, L), lambda n, j: (n, 0, j)),  # x tile
                pl.BlockSpec((C_out, C_in), lambda n, j: (0, 0)),     # fused Wc (resident)
                pl.BlockSpec((C_out, 1), lambda n, j: (0, 0)),        # fused bc (resident)
            ],
            out_specs=pl.BlockSpec((Nb, C_out, L), lambda n, j: (n, 0, j)),
        ),
        compiler_params=pltpu.CompilerParams(
            dimension_semantics=("parallel", "parallel")),
    )(x3d, wc, bc)

    return out3d.reshape(N, C_out, H, W)


def init_params(key, num_1, num_2, num_classes):
    """Deterministic synthetic weights (PyTorch Conv2d(k=1) stored as (in, out))."""
    ks = jax.random.split(key, 8)
    scale1 = 1.0 / jnp.sqrt(num_1)
    scale2 = 1.0 / jnp.sqrt(num_2)
    return {
        "w1_conf": jax.random.normal(ks[0], (num_1, num_2), jnp.float32) * scale1,
        "b1_conf": jax.random.normal(ks[1], (1, num_2), jnp.float32) * 0.01,
        "w2_conf": jax.random.normal(ks[2], (num_2, 1), jnp.float32) * scale2,
        "b2_conf": jax.random.normal(ks[3], (1, 1), jnp.float32) * 0.01,
        "w1_cls": jax.random.normal(ks[4], (num_1, num_2), jnp.float32) * scale1,
        "b1_cls": jax.random.normal(ks[5], (1, num_2), jnp.float32) * 0.01,
        "w2_cls": jax.random.normal(ks[6], (num_2, num_classes), jnp.float32) * scale2,
        "b2_cls": jax.random.normal(ks[7], (1, num_classes), jnp.float32) * 0.01,
    }


def reference_forward(x_nchw, params):
    """Pure-JAX reference of the PyTorch forward (non-fused) for correctness."""
    N, C, H, W = x_nchw.shape
    x2d = jnp.transpose(x_nchw, (0, 2, 3, 1)).reshape(-1, C)
    conf = jax.nn.sigmoid(
        (x2d @ params["w1_conf"] + params["b1_conf"]) @ params["w2_conf"]
        + params["b2_conf"])
    cls = ((x2d @ params["w1_cls"] + params["b1_cls"]) @ params["w2_cls"]
           + params["b2_cls"])
    out = jnp.concatenate([cls, conf], axis=-1)
    out = out.reshape(N, H, W, -1)
    return jnp.transpose(out, (0, 3, 1, 2))


if __name__ == "__main__":
    # Small shapes consistent with the module (num_1 -> num_2 -> {1, num_classes}).
    N, num_1, num_2, num_classes = 2, 32, 64, 7

    key = jax.random.PRNGKey(0)
    kx, kp, kx2 = jax.random.split(key, 3)
    params = init_params(kp, num_1, num_2, num_classes)

    # Case 1: small image (HW < lane_tile) -> whole image per tile, image batching path.
    H = W = 16
    x = jax.random.normal(kx, (N, num_1, H, W), jnp.float32)
    ref = jax.block_until_ready(reference_forward(x, params))
    out = jax.block_until_ready(grid_seg_forward(x, params))
    assert out.shape == (N, num_classes + 1, H, W), out.shape
    assert jnp.allclose(out, ref, atol=1e-4, rtol=1e-4), "mismatch vs reference (case 1)"

    # Case 2: HW (=324) not a multiple of the lane tile -> exercises Pallas
    # partial-boundary-block masking (no wrapper pad/slice passes).
    H2 = W2 = 18
    x2 = jax.random.normal(kx2, (N, num_1, H2, W2), jnp.float32)
    ref2 = jax.block_until_ready(reference_forward(x2, params))
    out2 = jax.block_until_ready(grid_seg_forward(x2, params, lane_tile=128))
    assert out2.shape == (N, num_classes + 1, H2, W2), out2.shape
    assert jnp.allclose(out2, ref2, atol=1e-4, rtol=1e-4), "mismatch vs reference (case 2)"

    # TODO(synk): image_size nearest-neighbor upsample branch, the
    # is_visualize_global_attention tuple return, and the loss/tensorboard/label
    # utilities are training/IO glue outside the forward hot path; not in-kernel.
    print("KERNEL_OK")
</pallas_src>

<mosaic_0001>
module attributes {stable_mosaic.version = 11 : i64} {
  func.func @grid_seg_kernel(%arg0: i32, %arg1: i32, %arg2: memref<1x32x256xf32, #tpu.memory_space<vmem>>, %arg3: memref<8x32xf32, #tpu.memory_space<vmem>>, %arg4: memref<8x1xf32, #tpu.memory_space<vmem>>, %arg5: memref<1x8x256xf32, #tpu.memory_space<vmem>>) attributes {dimension_semantics = [#tpu.dimension_semantics<parallel>, #tpu.dimension_semantics<parallel>], iteration_bounds = array<i64: 2, 1>, scalar_prefetch = 0 : i64, scratch_operands = 0 : i64, tpu.core_type = #tpu.core_type<tc>, window_params = [{transform_indices = @transform_0, window_bounds = array<i64: 1, 32, 256>}, {pipeline_mode = #tpu.pipeline_mode<synchronous>, transform_indices = @transform_1, window_bounds = array<i64: 8, 32>}, {pipeline_mode = #tpu.pipeline_mode<synchronous>, transform_indices = @transform_2, window_bounds = array<i64: 8, 1>}, {transform_indices = @transform_3, window_bounds = array<i64: 1, 8, 256>}]} {
    %c0 = arith.constant 0 : index
    %c0_0 = arith.constant 0 : index
    %0 = vector.load %arg3[%c0, %c0_0] : memref<8x32xf32, #tpu.memory_space<vmem>>, vector<8x32xf32>
    %c0_1 = arith.constant 0 : index
    %c0_2 = arith.constant 0 : index
    %1 = vector.load %arg4[%c0_1, %c0_2] : memref<8x1xf32, #tpu.memory_space<vmem>>, vector<8x1xf32>
    %c0_3 = arith.constant 0 : index
    %c0_4 = arith.constant 0 : index
    %c0_5 = arith.constant 0 : index
    %2 = vector.load %arg2[%c0_3, %c0_4, %c0_5] : memref<1x32x256xf32, #tpu.memory_space<vmem>>, vector<1x32x256xf32>
    %3 = vector.shape_cast %2 : vector<1x32x256xf32> to vector<32x256xf32>
    %cst = arith.constant dense<0.000000e+00> : vector<8x256xf32>
    %4 = tpu.matmul %0, %3, %cst {dimension_numbers = #tpu.dot_dimension_numbers<[1], [0], [0], [1], [0, 0, 1, 1], [], []>} : vector<8x32xf32>, vector<32x256xf32>, vector<8x256xf32> -> vector<8x256xf32>
    %5 = vector.broadcast %1 : vector<8x1xf32> to vector<8x256xf32>
    %6 = arith.addf %4, %5 : vector<8x256xf32>
    %7 = tpu.iota {dimensions = array<i32: 0>} : vector<8x256xi32>
    %c7_i32 = arith.constant 7 : i32
    %8 = vector.broadcast %c7_i32 : i32 to vector<8x256xi32>
    %9 = arith.cmpi eq, %7, %8 : vector<8x256xi32>
    %10 = arith.negf %6 : vector<8x256xf32>
    %11 = math.exp %10 : vector<8x256xf32>
    %cst_6 = arith.constant 1.000000e+00 : f32
    %12 = vector.broadcast %cst_6 : f32 to vector<8x256xf32>
    %13 = arith.addf %12, %11 : vector<8x256xf32>
    %14 = arith.divf %12, %13 : vector<8x256xf32>
    %15 = arith.select %9, %14, %6 : vector<8x256xi1>, vector<8x256xf32>
    %c0_7 = arith.constant 0 : index
    %c0_8 = arith.constant 0 : index
    %c0_9 = arith.constant 0 : index
    %16 = vector.load %arg5[%c0_7, %c0_8, %c0_9] : memref<1x8x256xf32, #tpu.memory_space<vmem>>, vector<1x8x256xf32>
    %17 = vector.shape_cast %16 : vector<1x8x256xf32> to vector<8x256xf32>
    %18 = vector.shape_cast %15 : vector<8x256xf32> to vector<1x8x256xf32>
    tpu.vector_store %arg5[%c0_7, %c0_8, %c0_9], %18 {strides = array<i32>} : memref<1x8x256xf32, #tpu.memory_space<vmem>>, vector<1x8x256xf32>,
    return
  }
  func.func @transform_0(%arg0: i32, %arg1: i32) -> (i32, i32, i32) {
    %c0_i32 = arith.constant 0 : i32
    %c0_i32_0 = arith.constant 0 : i32
    return %arg0, %c0_i32, %arg1 : i32, i32, i32
  }
  func.func @transform_1(%arg0: i32, %arg1: i32) -> (i32, i32) {
    %c0_i32 = arith.constant 0 : i32
    %c0_i32_0 = arith.constant 0 : i32
    %c0_i32_1 = arith.constant 0 : i32
    return %c0_i32, %c0_i32_0 : i32, i32
  }
  func.func @transform_2(%arg0: i32, %arg1: i32) -> (i32, i32) {
    %c0_i32 = arith.constant 0 : i32
    %c0_i32_0 = arith.constant 0 : i32
    %c0_i32_1 = arith.constant 0 : i32
    return %c0_i32, %c0_i32_0 : i32, i32
  }
  func.func @transform_3(%arg0: i32, %arg1: i32) -> (i32, i32, i32) {
    %c0_i32 = arith.constant 0 : i32
    %c0_i32_0 = arith.constant 0 : i32
    return %arg0, %c0_i32, %arg1 : i32, i32, i32
  }
}

</mosaic_0001>

<llo_original>
// kernel: tpu_custom_call.1
$region0: #{tpu_custom_call.1}
  #allocation0 [shape = 'u32[]', space=smem, size = 0x4, offset = 0x4, fixed_abs, tag = 'smem constant byte address 0x4 - core index']
  #allocation1 [shape = 'u32[144,128]{1,0:T(1,128)}', space=vmem, size = 0x12000, scoped, tag = 'internal scratch']
  %s0 = inlined_call_operand.hbm [shape: f32[2,32,256], index: 0, kind: input, shape index: {}]
  %s1 = inlined_call_operand.vmem [shape: f32[8,32], index: 1, kind: input, shape index: {}]
  %s2 = inlined_call_operand.vmem [shape: f32[8,1], index: 2, kind: input, shape index: {}]
  %s3 = inlined_call_operand.hbm [shape: f32[2,8,256], index: 3, kind: output, shape index: {}]
  %s4 = sld [smem:[#allocation0]]
  $region49: #{tpu_custom_call.1} parent=0
    _
  %s6 = ssub.s32 1, %s4
  %s7 = scalar_select 0, %s6, %s4
  $region1: #{tpu_custom_call.1} parent=0
    #allocation2 [shape = 'u8[65536]{0}', space=vmem, size = 0x10000, scoped, tag = 'input window, operand 0']
    #allocation3 [shape = 's32[2]{0}', space=sflag, size = 0x8, scoped, tag = 'scoped memory for tpu_custom_call.1']
    #allocation4 [shape = 's32[2]{0}', space=sflag, size = 0x8, scoped, tag = 'scoped memory for tpu_custom_call.1']
    #allocation5 [shape = 'u8[16384]{0}', space=vmem, size = 0x4000, scoped, tag = 'output window, operand 0']
    %8 = vsyncpa [#allocation3], 0
    %s9 = scalar_lea.sflag [#allocation3], 1
    %10 = vsyncpa %s9, 0
    %11 = vsyncpa [#allocation4], 0
    %s12 = scalar_lea.sflag [#allocation4], 1
    %13 = vsyncpa %s12, 0
    loop: start=0, step=1, limit=4
    $region2: #{tpu_custom_call.1} parent=1 // loop_pre_header
      _
    $region3: #{tpu_custom_call.1} parent=1 // loop_header
      %s15 = sphi 0, %s19
      %p16 = scmp.ge.s32.totalorder %s15, 4
      %s22 = sphi 0, %s34
      %s23 = sphi 0, %s30
      %s24 = sphi 0, %s22
      %s25 = sphi 0, %s23
      %s26 = sphi 0, %s24
      %s27 = sphi 0, %s25
      %s39 = sphi 0, %s41
      %s42 = sphi 0, %s39
      %s43 = sphi 0, %s42
      %s59 = sphi 0, %s43
      %s63 = sphi 0, %s63
      %s65 = sphi 0, %s63
      %s66 = sphi 0, %s65
      %s80 = sphi 0, %s66
      %s84 = sphi 0, %s84
      %s86 = sphi 0, %s84
      %s87 = sphi 0, %s86
      %s101 = sphi 0, %s87
      %s109 = sphi 0, %s111
      %s112 = sphi 0, %s109
      %s113 = sphi 0, %s112
      %s129 = sphi 0, %s113
    $region4: #{tpu_custom_call.1} parent=1 // loop_header_branch
      %18 = sbr.rel (%p16) target = $region8
    $region5: #{tpu_custom_call.1} parent=1 // loop_body
      %s20 = ssub.s32 %s15, 1
      %s21 = ssub.s32 %s15, 2
      %s28 = sadd.s32 1, %s23
      %p29 = scmp.ge.s32.totalorder %s28, 1
      %s30 = scalar_select %p29, 0, %s28
      %s31 = sadd.s32 1, %s22
      %s32 = scalar_select %p29, %s31, %s22
      %p33 = scmp.ge.s32.totalorder %s32, 2
      %s34 = scalar_select %p33, 0, %s32
      %s35 = ssub.s32 %s22, %s34
      %s36 = ssub.s32 %s23, %s30
      %s37 = sor.u32 %s35, %s36
      %p38 = scmp.eq.s32.totalorder %s37, 0
      %s40 = sadd.s32 %s39, 1
      %s41 = scalar_select %p38, %s39, %s40
      %p44 = pneg %p38
      %p45 = scmp.eq.s32.totalorder %s15, 1
      %p46 = por %p44, %p45
      %p47 = scmp.ne.s32.totalorder %s39, %s42
      %p48 = scmp.eq.s32.totalorder %s15, 0
      %p49 = por %p47, %p48
      %p50 = scmp.ne.s32.totalorder %s39, %s42
      %p51 = scmp.eq.s32.totalorder %s20, 1
      %p52 = por %p50, %p51
      %p53 = scmp.ne.s32.totalorder %s42, %s43
      %p54 = scmp.eq.s32.totalorder %s20, 0
      %p55 = por %p53, %p54
      %p56 = scmp.ne.s32.totalorder %s42, %s43
      %p57 = scmp.eq.s32.totalorder %s21, 1
      %p58 = por %p56, %p57
      %p60 = scmp.ne.s32.totalorder %s43, %s59
      %p61 = scmp.eq.s32.totalorder %s21, 0
      %p62 = por %p60, %p61
      %s64 = sadd.s32 %s63, 1
      %p67 = scmp.eq.s32.totalorder %s15, 1
      %p68 = scmp.ne.s32.totalorder %s63, %s65
      %p69 = scmp.eq.s32.totalorder %s15, 0
      %p70 = por %p68, %p69
      %p71 = scmp.ne.s32.totalorder %s63, %s65
      %p72 = scmp.eq.s32.totalorder %s20, 1
      %p73 = por %p71, %p72
      %p74 = scmp.ne.s32.totalorder %s65, %s66
      %p75 = scmp.eq.s32.totalorder %s20, 0
      %p76 = por %p74, %p75
      %p77 = scmp.ne.s32.totalorder %s65, %s66
      %p78 = scmp.eq.s32.totalorder %s21, 1
      %p79 = por %p77, %p78
      %p81 = scmp.ne.s32.totalorder %s66, %s80
      %p82 = scmp.eq.s32.totalorder %s21, 0
      %p83 = por %p81, %p82
      %s85 = sadd.s32 %s84, 1
      %p88 = scmp.eq.s32.totalorder %s15, 1
      %p89 = scmp.ne.s32.totalorder %s84, %s86
      %p90 = scmp.eq.s32.totalorder %s15, 0
      %p91 = por %p89, %p90
      %p92 = scmp.ne.s32.totalorder %s84, %s86
      %p93 = scmp.eq.s32.totalorder %s20, 1
      %p94 = por %p92, %p93
      %p95 = scmp.ne.s32.totalorder %s86, %s87
      %p96 = scmp.eq.s32.totalorder %s20, 0
      %p97 = por %p95, %p96
      %p98 = scmp.ne.s32.totalorder %s86, %s87
      %p99 = scmp.eq.s32.totalorder %s21, 1
      %p100 = por %p98, %p99
      %p102 = scmp.ne.s32.totalorder %s87, %s101
      %p103 = scmp.eq.s32.totalorder %s21, 0
      %p104 = por %p102, %p103
      %s105 = ssub.s32 %s22, %s34
      %s106 = ssub.s32 %s23, %s30
      %s107 = sor.u32 %s105, %s106
      %p108 = scmp.eq.s32.totalorder %s107, 0
      %s110 = sadd.s32 %s109, 1
      %s111 = scalar_select %p108, %s109, %s110
      %p114 = pneg %p108
      %p115 = scmp.eq.s32.totalorder %s15, 1
      %p116 = por %p114, %p115
      %p117 = scmp.ne.s32.totalorder %s109, %s112
      %p118 = scmp.eq.s32.totalorder %s15, 0
      %p119 = por %p117, %p118
      %p120 = scmp.ne.s32.totalorder %s109, %s112
      %p121 = scmp.eq.s32.totalorder %s20, 1
      %p122 = por %p120, %p121
      %p123 = scmp.ne.s32.totalorder %s112, %s113
      %p124 = scmp.eq.s32.totalorder %s20, 0
      %p125 = por %p123, %p124
      %p126 = scmp.ne.s32.totalorder %s112, %s113
      %p127 = scmp.eq.s32.totalorder %s21, 1
      %p128 = por %p126, %p127
      %p130 = scmp.ne.s32.totalorder %s113, %s129
      %p131 = scmp.eq.s32.totalorder %s21, 0
      %p132 = por %p130, %p131
      %p133 = scmp.le.s32.totalorder 1, %s15
      %p134 = scmp.lt.s32.totalorder %s15, 3
      %p135 = pnand %p133, %p134
      %p136 = pneg %p135
      // Predicated region
      $region9: #{tpu_custom_call.1} parent=5 // pred_check
        _
      $region10: #{tpu_custom_call.1} parent=5 // pred_check_branch
        %138 = sbr.rel (%p135) target = $region12
      $region11: #{tpu_custom_call.1} parent=5 // pred_region
        %s139 = ssub.s32 %s15, 1
        // Predicated region
        $region13: #{tpu_custom_call.1} parent=11 // pred_check
          %p140 = pneg %p76
        $region14: #{tpu_custom_call.1} parent=11 // pred_check_branch
          %142 = sbr.rel (%p140) target = $region16
        $region15: #{tpu_custom_call.1} parent=11 // pred_region
          _
        $region16: #{tpu_custom_call.1} parent=11 // pred_fallthru
          _
        // Predicated region
        $region17: #{tpu_custom_call.1} parent=11 // pred_check
          %p143 = pneg %p97
        $region18: #{tpu_custom_call.1} parent=11 // pred_check_branch
          %145 = sbr.rel (%p143) target = $region20
        $region19: #{tpu_custom_call.1} parent=11 // pred_region
          _
        $region20: #{tpu_custom_call.1} parent=11 // pred_fallthru
          _
      $region12: #{tpu_custom_call.1} parent=5 // pred_fallthru
        _
      %p146 = scmp.lt.s32.totalorder %s15, 2
      // Predicated region
      $region21: #{tpu_custom_call.1} parent=5 // pred_check
        %p147 = pneg %p146
      $region22: #{tpu_custom_call.1} parent=5 // pred_check_branch
        %149 = sbr.rel (%p147) target = $region24
      $region23: #{tpu_custom_call.1} parent=5 // pred_region
        // Predicated region
        $region25: #{tpu_custom_call.1} parent=23 // pred_check
          %p150 = pneg %p49
        $region26: #{tpu_custom_call.1} parent=23 // pred_check_branch
          %152 = sbr.rel (%p150) target = $region28
        $region27: #{tpu_custom_call.1} parent=23 // pred_region
          %s153 = sand.u32 %s39, 1
          %s154 = scalar_lea.sflag [#allocation3], %s153
          %s155 = sand.u32 %s39, 1
          %s156 = smul.addr %s155, 64
          %s157 = scalar_lea.vmem [#allocation2], %s156
          %s158 = smul.u32 2, %s23
          %s160 = ssub.s32 1024, 1024
          %161 = vsyncadd %s154, %s160
          %s162 = smul.addr %s22, 8
          %s163 = sadd.s32 %s158, %s162
          %s164 = smul.addr %s163, 128
          %s165 = scalar_lea.hbm %s0, %s164
          %s166 = sshll.u32 %s157, 4
          %s167 = int_to_ptr.vmem [resolvable:$true] %s166
          %172 = dma.hbm_to_vmem [thread:$0]  %s165, 1024, %s167, %s154, 256, 256, 16
        $region28: #{tpu_custom_call.1} parent=23 // pred_fallthru
          _
      $region24: #{tpu_custom_call.1} parent=5 // pred_fallthru
        _
      %p173 = scmp.le.s32.totalorder 1, %s15
      %p174 = scmp.lt.s32.totalorder %s15, 3
      %p175 = pnand %p173, %p174
      %p176 = pneg %p175
      // Predicated region
      $region29: #{tpu_custom_call.1} parent=5 // pred_check
        _
      $region30: #{tpu_custom_call.1} parent=5 // pred_check_branch
        %178 = sbr.rel (%p175) target = $region32
      $region31: #{tpu_custom_call.1} parent=5 // pred_region
        %s179 = ssub.s32 %s15, 1
        %s180 = sand.u32 %s42, 1
        %s181 = scalar_lea.sflag [#allocation3], %s180
        %s182 = sand.u32 %s42, 1
        %s183 = smul.addr %s182, 64
        %s184 = scalar_lea.vmem [#allocation2], %s183
        // Predicated region
        $region33: #{tpu_custom_call.1} parent=31 // pred_check
          %p185 = pneg %p55
        $region34: #{tpu_custom_call.1} parent=31 // pred_check_branch
          %187 = sbr.rel (%p185) target = $region36
        $region35: #{tpu_custom_call.1} parent=31 // pred_region
          %188 = dma.done %s181, 1024
        $region36: #{tpu_custom_call.1} parent=31 // pred_fallthru
          _
        %s189 = sand.u32 %s42, 1
        %s190 = scalar_lea.sflag [#allocation3], %s189
        %s191 = sand.u32 %s42, 1
        %s192 = smul.addr %s191, 64
        %s193 = scalar_lea.vmem [#allocation2], %s192
        %p194 = pneg %p55
        %p195 = pneg %p52
        %p196 = pneg %p76
        %p197 = pneg %p73
        %p198 = pneg %p97
        %p199 = pneg %p94
        %p200 = pneg %p125
        %p201 = pneg %p122
        %s202 = sand.u32 %s112, 1
        %s203 = scalar_lea.sflag [#allocation4], %s202
        %s204 = sand.u32 %s112, 1
        %s205 = smul.addr %s204, 16
        %s206 = scalar_lea.vmem [#allocation5], %s205
        %s207 = smul.u32 2, %s25
        %s208 = smul.u32 2, %s25
        %v209 = vld [vmem:[%s1] sm:$0xff]
        %v210 = vld [vmem:[%s2] sm:$0xff]
        %v211 = vld [vmem:[%s184] sm:$0xff]
        %v212 = vld [vmem:[%s184 + $0x8] sm:$0xff]
        %v213 = vld [vmem:[%s184 + $0x10] sm:$0xff]
        %v214 = vld [vmem:[%s184 + $0x18] sm:$0xff]
        %v215 = vld [vmem:[%s184 + $0x20] sm:$0xff]
        %v216 = vld [vmem:[%s184 + $0x28] sm:$0xff]
        %v217 = vld [vmem:[%s184 + $0x30] sm:$0xff]
        %v218 = vld [vmem:[%s184 + $0x38] sm:$0xff]
        %220 = vset.pattern.permute.xlu0 0
        %221 = vperm.xlu0 %220, %v210
        %v222 = vpop.permute.xlu0 %221
        %vm224 = vcmask 261120
        %v226 = vsel %vm224, %v209, 0
        %228 = vmatprep.subr.mxu0 %v212
        %229 = vmatpush1.msra.mxu0 %v211
        %230 = vmatprep.subr.mxu0 %v214
        %231 = vmatpush1.msra.mxu0 %v213
        %232 = vmatprep.subr.mxu0 %v216
        %233 = vmatpush1.msra.mxu0 %v215
        %234 = vmatprep.subr.mxu0 %v218
        %235 = vmatpush1.msra.mxu0 %v217
        %236 = vmatprep.subr.mxu0 0.0
        %237 = vmatpush1.msra.mxu0 0.0
        %238 = vmatprep.subr.mxu0 0.0
        %239 = vmatpush1.msra.mxu0 0.0
        %240 = vmatprep.subr.mxu0 0.0
        %241 = vmatpush1.msra.mxu0 0.0
        %242 = vmatprep.subr.mxu0 0.0
        %243 = vmatpush1.msra.mxu0 0.0
        %244 = vmatprep.subr.mxu0 0.0
        %245 = vmatpush1.msra.mxu0 0.0
        %246 = vmatprep.subr.mxu0 0.0
        %247 = vmatpush1.msra.mxu0 0.0
        %248 = vmatprep.subr.mxu0 0.0
        %249 = vmatpush1.msra.mxu0 0.0
        %250 = vmatprep.subr.mxu0 0.0
        %251 = vmatpush1.msra.mxu0 0.0
        %252 = vmatprep.subr.mxu0 0.0
        %253 = vmatpush1.msra.mxu0 0.0
        %254 = vmatprep.subr.mxu0 0.0
        %255 = vmatpush1.msra.mxu0 0.0
        %256 = vmatprep.subr.mxu0 0.0
        %257 = vmatpush1.msra.mxu0 0.0
        %258 = vmatprep.subr.mxu0 0.0
        %259 = vmatpush1.msra.mxu0 0.0
        %260 = vmatprep.subr.mxu0 0.0
        %261 = vmatpush1.msra.mxu0 0.0
        %262 = vmatprep.subr.mxu0 0.0
        %263 = vmatpush1.msra.mxu0 0.0
        %264 = vmatprep.subr.mxu0 0.0
        %265 = vmatpush1.msra.mxu0 0.0
        %266 = vmatprep.subr.mxu0 0.0
        %267 = vmatpush1.msra.mxu0 0.0
        %268 = vmatprep.subr.mxu0 0.0
        %269 = vmatpush1.msra.mxu0 0.0
        %270 = vmatprep.subr.mxu0 0.0
        %271 = vmatpush1.msra.mxu0 0.0
        %272 = vmatprep.subr.mxu0 0.0
        %273 = vmatpush1.msra.mxu0 0.0
        %274 = vmatprep.subr.mxu0 0.0
        %275 = vmatpush1.msra.mxu0 0.0
        %276 = vmatprep.subr.mxu0 0.0
        %277 = vmatpush1.msra.mxu0 0.0
        %278 = vmatprep.subr.mxu0 0.0
        %279 = vmatpush1.msra.mxu0 0.0
        %280 = vmatprep.subr.mxu0 0.0
        %281 = vmatpush1.msra.mxu0 0.0
        %282 = vmatprep.subr.mxu0 0.0
        %283 = vmatpush1.msra.mxu0 0.0
        %284 = vmatprep.subr.mxu0 0.0
        %285 = vmatpush1.msra.mxu0 0.0
        %286 = vmatprep.subr.mxu0 0.0
        %287 = vmatpush1.msra.mxu0 0.0
        %288 = vmatprep.subr.mxu0 0.0
        %289 = vmatpush1.msra.mxu0 0.0
        %290 = vmatprep.subr.mxu0 0.0
        %291 = vmatpush1.msra.mxu0 0.0
        %292 = vmatprep.mubr.f32.mxu0 0.0
        %293 = vmatmul.mubr.f32.gmra.mrb[0].mxu0 %v226
        %v294 = vpop.f32.mrb[0].mxu0
        %v295 = vadd.f32 %v222, %v294
        %v296 = vpop.f32.mrb[0].mxu0
        %v297 = vadd.f32 %v222, %v296
        %298 = vdwg.mxu0
        %v299 = vlaneseq
        %v300 = vshrl.u32 %v299, 7
        %vm301 = vcmp.eq.s32.totalorder %v300, 7
        %v302 = vxor.u32 %v295, 2147483648
        %v303 = vxor.u32 %v297, 2147483648
        %v304 = vmul.f32 %v302, 1.442695
        %v305 = vpow.pop %v304
        %v306 = vmul.f32 %v303, 1.442695
        %v307 = vpow.pop %v306
        %v308 = vadd.f32 %v305, 1.0
        %v309 = vadd.f32 %v307, 1.0
        %v310 = vrcp.pop %v308
        %v311 = vmul.f32 1.0, %v310
        %v312 = vrcp.pop %v309
        %v313 = vmul.f32 1.0, %v312
        %v314 = vsel %vm301, %v311, %v295
        %v315 = vsel %vm301, %v313, %v297
        %316 = vst [vmem:[%s206] sm:$0xff] %v314
        %317 = vst [vmem:[%s206 + $0x8] sm:$0xff] %v315
        %s318 = sand.u32 %s112, 1
        %s319 = scalar_lea.sflag [#allocation4], %s318
        %s320 = sand.u32 %s112, 1
        %s321 = smul.addr %s320, 16
        %s322 = scalar_lea.vmem [#allocation5], %s321
        // Predicated region
        $region37: #{tpu_custom_call.1} parent=31 // pred_check
          %p323 = pneg %p122
        $region38: #{tpu_custom_call.1} parent=31 // pred_check_branch
          %325 = sbr.rel (%p323) target = $region40
        $region39: #{tpu_custom_call.1} parent=31 // pred_region
          %s326 = smul.u32 2, %s25
          %s328 = ssub.s32 256, 256
          %329 = vsyncadd %s319, %s328
          %s330 = smul.addr %s24, 2
          %s331 = sadd.s32 %s326, %s330
          %s332 = smul.addr %s331, 128
          %s333 = scalar_lea.hbm %s3, %s332
          %s335 = sshll.u32 %s322, 4
          %s336 = int_to_ptr.vmem [resolvable:$true] %s335
          %338 = dma.vmem_to_hbm [thread:$0]  %s336, 256, %s333, %s319
        $region40: #{tpu_custom_call.1} parent=31 // pred_fallthru
          _
      $region32: #{tpu_custom_call.1} parent=5 // pred_fallthru
        _
      %p339 = scmp.le.s32.totalorder 2, %s15
      // Predicated region
      $region41: #{tpu_custom_call.1} parent=5 // pred_check
        %p340 = pneg %p339
      $region42: #{tpu_custom_call.1} parent=5 // pred_check_branch
        %342 = sbr.rel (%p340) target = $region44
      $region43: #{tpu_custom_call.1} parent=5 // pred_region
        %s343 = ssub.s32 %s15, 2
        // Predicated region
        $region45: #{tpu_custom_call.1} parent=43 // pred_check
          %p344 = pneg %p128
        $region46: #{tpu_custom_call.1} parent=43 // pred_check_branch
          %346 = sbr.rel (%p344) target = $region48
        $region47: #{tpu_custom_call.1} parent=43 // pred_region
          %s347 = sand.u32 %s113, 1
          %s348 = scalar_lea.sflag [#allocation4], %s347
          %s349 = sand.u32 %s113, 1
          %s350 = smul.addr %s349, 16
          %s351 = scalar_lea.vmem [#allocation5], %s350
          %352 = dma.done %s348, 256
        $region48: #{tpu_custom_call.1} parent=43 // pred_fallthru
          _
      $region44: #{tpu_custom_call.1} parent=5 // pred_fallthru
        _
    $region6: #{tpu_custom_call.1} parent=1 // loop_footer
      %s19 = sadd.s32 1, %s15
    $region7: #{tpu_custom_call.1} parent=1 // loop_footer_branch
      %14 = sbr.rel target = $region3
    $region8: #{tpu_custom_call.1} parent=1 // loop_exit
      _
    %353 = vsyncpa [#allocation3], 1
    %s354 = scalar_lea.sflag [#allocation3], 1
    %355 = vsyncpa %s354, 1
    %356 = vsyncpa [#allocation4], 1
    %s357 = scalar_lea.sflag [#allocation4], 1
    %358 = vsyncpa %s357, 1

</llo_original>
